<compile_context>
chip_gen: v7x
topology: tpu7x:2x2x1
jax: 0.10.0
libtpu: 0.0.40
codegen_flags: <defaults>
</compile_context>

<pallas_src>
import functools

import jax
import jax.numpy as jnp
from jax.experimental import pallas as pl
from jax.experimental.pallas import tpu as pltpu


def _round_up(x, m):
    return ((x + m - 1) // m) * m


def _mlp_kernel(x_ref, w_ref, b_ref, o_ref, *, num_hidden):
    """Fused MLP on one (tm, Dp) activation tile; all layers unrolled in-kernel.

    x_ref: (tm, Dp)   activation tile (zero-padded lanes)
    w_ref: (L, Dp, Dp) stacked, zero-padded weights (VMEM-resident)
    b_ref: (L, 1, Dp)  stacked, zero-padded biases
    o_ref: (tm, Dp)   output tile (lane-dense store)
    """
    h = x_ref[...].astype(jnp.float32)
    # Hidden layers: Linear + ReLU.  Dropout is identity at inference.
    # TODO(synk): nn.Dropout in training mode (stochastic mask) is not implemented;
    # inference-mode identity is used, which matches eval() semantics.
    for l in range(num_hidden):
        h = jnp.dot(h, w_ref[l], preferred_element_type=jnp.float32)
        h = jnp.maximum(h + b_ref[l].astype(jnp.float32), 0.0)
    # Output layer: Linear only.
    h = jnp.dot(h, w_ref[num_hidden], preferred_element_type=jnp.float32)
    h = h + b_ref[num_hidden].astype(jnp.float32)
    o_ref[...] = h.astype(o_ref.dtype)


def init_params(key, config, dtype=jnp.float32):
    """Build (W, b) pairs matching the PyTorch module's layer stack.

    Weights are stored as (in, out) so the kernel computes x @ W + b
    (mathematically identical to torch's x @ W_t.T + b).
    """
    input_size = config["input_size"] * config["sequence_length"]
    hidden = config["hidden_size"]
    out_size = config["output_size"]
    num_layers = config["num_layers"]

    dims = [input_size] + [hidden] * num_layers + [out_size]
    params = []
    for i in range(len(dims) - 1):
        key, kw, kb = jax.random.split(key, 3)
        fan_in = dims[i]
        bound = 1.0 / (fan_in ** 0.5)
        w = jax.random.uniform(kw, (dims[i], dims[i + 1]), dtype, -bound, bound)
        b = jax.random.uniform(kb, (dims[i + 1],), dtype, -bound, bound)
        params.append((w, b))
    return params


def prepare_params(params, *, lane=128):
    """Pad every layer to a common (Dp, Dp) and stack — done ONCE, off the hot path."""
    dims = [params[0][0].shape[0]] + [w.shape[1] for w, _ in params]
    Dp = _round_up(max(dims), lane)
    w_stack = jnp.stack(
        [jnp.pad(w, ((0, Dp - w.shape[0]), (0, Dp - w.shape[1]))) for w, _ in params]
    )
    b_stack = jnp.stack(
        [jnp.pad(b, (0, Dp - b.shape[0])).reshape(1, Dp) for _, b in params]
    )
    # Fused path keeps the whole weight stack VMEM-resident (double-buffered):
    # must stay well under the scoped-VMEM budget (smallest: v7x 64 MiB/TC).
    stack_bytes = 2 * w_stack.size * w_stack.dtype.itemsize
    assert stack_bytes < 16 * 1024 * 1024, (
        "Weight stack too large for the fused VMEM-resident path; "
        "fall back to a per-layer tiled matmul for this config."
    )
    return w_stack, b_stack


def fully_connected_forward(x, w_stack, b_stack, *, output_size):
    """Forward pass of FullyConnectedNetwork: returns (elbow, wrist, fmg)."""
    batch = x.shape[0]
    h = x.reshape(batch, -1)
    M, K = h.shape
    L, Dp, _ = w_stack.shape
    num_hidden = L - 1
    assert K <= Dp

    # Batch tile: sublane multiple of 8; capped at 128 so larger batches give
    # >= 2 "parallel" blocks (keeps both v7x TensorCores busy).
    tm = min(128, _round_up(M, 8))
    Mp = _round_up(M, tm)

    # Only per-call pad: the (tiny) input activation, to lane-aligned Dp.
    hp = jnp.pad(h, ((0, Mp - M), (0, Dp - K)))

    yp = pl.pallas_call(
        functools.partial(_mlp_kernel, num_hidden=num_hidden),
        out_shape=jax.ShapeDtypeStruct((Mp, Dp), x.dtype),
        grid_spec=pltpu.PrefetchScalarGridSpec(
            num_scalar_prefetch=0,
            grid=(Mp // tm,),
            in_specs=[
                pl.BlockSpec((tm, Dp), lambda i: (i, 0)),
                # Constant index_map -> weights/biases fetched once, VMEM-resident.
                pl.BlockSpec((L, Dp, Dp), lambda i: (0, 0, 0)),
                pl.BlockSpec((L, 1, Dp), lambda i: (0, 0, 0)),
            ],
            out_specs=pl.BlockSpec((tm, Dp), lambda i: (i, 0)),
        ),
        compiler_params=pltpu.CompilerParams(
            dimension_semantics=("parallel",),
        ),
    )(hp, w_stack, b_stack)

    y = yp[:M, :output_size]
    elbow = y[:, :3]
    wrist = y[:, 3:]
    fmg = 0
    return elbow, wrist, fmg


def _reference_forward(x, params):
    """Pure-JAX reference reproducing the PyTorch forward."""
    batch = x.shape[0]
    h = x.reshape(batch, -1)
    for w, b in params[:-1]:
        h = jnp.maximum(h @ w + b, 0.0)
    w, b = params[-1]
    y = h @ w + b
    return y[:, :3], y[:, 3:], 0


if __name__ == "__main__":
    config = {
        "input_size": 4,
        "sequence_length": 8,
        "output_size": 7,   # elbow (3) + wrist (4)
        "hidden_size": 32,
        "num_layers": 2,
        "dropout": 0.0,
    }

    key = jax.random.PRNGKey(0)
    key, kx = jax.random.split(key)
    # (batch, sequence_length, input_size) -> flattened to input_size*sequence_length
    x = jax.random.normal(
        kx, (2, config["sequence_length"], config["input_size"]), dtype=jnp.float32
    )
    params = init_params(key, config)
    w_stack, b_stack = prepare_params(params)  # padded once, off the hot path

    fwd = jax.jit(
        functools.partial(fully_connected_forward, output_size=config["output_size"])
    )
    elbow, wrist, fmg = fwd(x, w_stack, b_stack)
    elbow = jax.block_until_ready(elbow)
    wrist = jax.block_until_ready(wrist)

    elbow_ref, wrist_ref, fmg_ref = _reference_forward(x, params)
    assert elbow.shape == (2, 3) and wrist.shape == (2, config["output_size"] - 3)
    assert int(fmg) == 0 and fmg_ref == 0
    assert jnp.max(jnp.abs(elbow - elbow_ref)) < 1e-4
    assert jnp.max(jnp.abs(wrist - wrist_ref)) < 1e-4

    print("KERNEL_OK")
</pallas_src>

<mosaic_0001>
module attributes {stable_mosaic.version = 11 : i64} {
  func.func @_mlp_kernel(%arg0: i32, %arg1: memref<8x128xf32, #tpu.memory_space<vmem>>, %arg2: memref<3x128x128xf32, #tpu.memory_space<vmem>>, %arg3: memref<3x1x128xf32, #tpu.memory_space<vmem>>, %arg4: memref<8x128xf32, #tpu.memory_space<vmem>>) attributes {dimension_semantics = [#tpu.dimension_semantics<parallel>], iteration_bounds = array<i64: 1>, scalar_prefetch = 0 : i64, scratch_operands = 0 : i64, tpu.core_type = #tpu.core_type<tc>, window_params = [{transform_indices = @transform_0, window_bounds = array<i64: 8, 128>}, {pipeline_mode = #tpu.pipeline_mode<synchronous>, transform_indices = @transform_1, window_bounds = array<i64: 3, 128, 128>}, {pipeline_mode = #tpu.pipeline_mode<synchronous>, transform_indices = @transform_2, window_bounds = array<i64: 3, 1, 128>}, {transform_indices = @transform_3, window_bounds = array<i64: 8, 128>}]} {
    %c0 = arith.constant 0 : index
    %c0_0 = arith.constant 0 : index
    %0 = vector.load %arg1[%c0, %c0_0] : memref<8x128xf32, #tpu.memory_space<vmem>>, vector<8x128xf32>
    %c0_1 = arith.constant 0 : index
    %c0_2 = arith.constant 0 : index
    %c0_3 = arith.constant 0 : index
    %1 = vector.load %arg2[%c0_1, %c0_2, %c0_3] : memref<3x128x128xf32, #tpu.memory_space<vmem>>, vector<1x128x128xf32>
    %2 = vector.shape_cast %1 : vector<1x128x128xf32> to vector<128x128xf32>
    %cst = arith.constant dense<0.000000e+00> : vector<8x128xf32>
    %3 = tpu.matmul %0, %2, %cst {dimension_numbers = #tpu.dot_dimension_numbers<[1], [0], [0], [1], [0, 0, 1, 1], [], []>} : vector<8x128xf32>, vector<128x128xf32>, vector<8x128xf32> -> vector<8x128xf32>
    %c0_4 = arith.constant 0 : index
    %c0_5 = arith.constant 0 : index
    %c0_6 = arith.constant 0 : index
    %4 = vector.load %arg3[%c0_4, %c0_5, %c0_6] : memref<3x1x128xf32, #tpu.memory_space<vmem>>, vector<1x1x128xf32>
    %5 = vector.shape_cast %4 : vector<1x1x128xf32> to vector<1x128xf32>
    %6 = vector.broadcast %5 : vector<1x128xf32> to vector<8x128xf32>
    %7 = arith.addf %3, %6 : vector<8x128xf32>
    %cst_7 = arith.constant 0.000000e+00 : f32
    %8 = vector.broadcast %cst_7 : f32 to vector<8x128xf32>
    %9 = arith.maximumf %7, %8 : vector<8x128xf32>
    %c1 = arith.constant 1 : index
    %c0_8 = arith.constant 0 : index
    %c0_9 = arith.constant 0 : index
    %10 = vector.load %arg2[%c1, %c0_8, %c0_9] : memref<3x128x128xf32, #tpu.memory_space<vmem>>, vector<1x128x128xf32>
    %11 = vector.shape_cast %10 : vector<1x128x128xf32> to vector<128x128xf32>
    %cst_10 = arith.constant dense<0.000000e+00> : vector<8x128xf32>
    %12 = tpu.matmul %9, %11, %cst_10 {dimension_numbers = #tpu.dot_dimension_numbers<[1], [0], [0], [1], [0, 0, 1, 1], [], []>} : vector<8x128xf32>, vector<128x128xf32>, vector<8x128xf32> -> vector<8x128xf32>
    %c1_11 = arith.constant 1 : index
    %c0_12 = arith.constant 0 : index
    %c0_13 = arith.constant 0 : index
    %13 = vector.load %arg3[%c1_11, %c0_12, %c0_13] : memref<3x1x128xf32, #tpu.memory_space<vmem>>, vector<1x1x128xf32>
    %14 = vector.shape_cast %13 : vector<1x1x128xf32> to vector<1x128xf32>
    %15 = vector.broadcast %14 : vector<1x128xf32> to vector<8x128xf32>
    %16 = arith.addf %12, %15 : vector<8x128xf32>
    %cst_14 = arith.constant 0.000000e+00 : f32
    %17 = vector.broadcast %cst_14 : f32 to vector<8x128xf32>
    %18 = arith.maximumf %16, %17 : vector<8x128xf32>
    %c2 = arith.constant 2 : index
    %c0_15 = arith.constant 0 : index
    %c0_16 = arith.constant 0 : index
    %19 = vector.load %arg2[%c2, %c0_15, %c0_16] : memref<3x128x128xf32, #tpu.memory_space<vmem>>, vector<1x128x128xf32>
    %20 = vector.shape_cast %19 : vector<1x128x128xf32> to vector<128x128xf32>
    %cst_17 = arith.constant dense<0.000000e+00> : vector<8x128xf32>
    %21 = tpu.matmul %18, %20, %cst_17 {dimension_numbers = #tpu.dot_dimension_numbers<[1], [0], [0], [1], [0, 0, 1, 1], [], []>} : vector<8x128xf32>, vector<128x128xf32>, vector<8x128xf32> -> vector<8x128xf32>
    %c2_18 = arith.constant 2 : index
    %c0_19 = arith.constant 0 : index
    %c0_20 = arith.constant 0 : index
    %22 = vector.load %arg3[%c2_18, %c0_19, %c0_20] : memref<3x1x128xf32, #tpu.memory_space<vmem>>, vector<1x1x128xf32>
    %23 = vector.shape_cast %22 : vector<1x1x128xf32> to vector<1x128xf32>
    %24 = vector.broadcast %23 : vector<1x128xf32> to vector<8x128xf32>
    %25 = arith.addf %21, %24 : vector<8x128xf32>
    %c0_21 = arith.constant 0 : index
    %c0_22 = arith.constant 0 : index
    %26 = vector.load %arg4[%c0_21, %c0_22] : memref<8x128xf32, #tpu.memory_space<vmem>>, vector<8x128xf32>
    tpu.vector_store %arg4[%c0_21, %c0_22], %25 {strides = array<i32>} : memref<8x128xf32, #tpu.memory_space<vmem>>, vector<8x128xf32>,
    return
  }
  func.func @transform_0(%arg0: i32) -> (i32, i32) {
    %c0_i32 = arith.constant 0 : i32
    %c0_i32_0 = arith.constant 0 : i32
    return %arg0, %c0_i32 : i32, i32
  }
  func.func @transform_1(%arg0: i32) -> (i32, i32, i32) {
    %c0_i32 = arith.constant 0 : i32
    %c0_i32_0 = arith.constant 0 : i32
    %c0_i32_1 = arith.constant 0 : i32
    %c0_i32_2 = arith.constant 0 : i32
    return %c0_i32, %c0_i32_0, %c0_i32_1 : i32, i32, i32
  }
  func.func @transform_2(%arg0: i32) -> (i32, i32, i32) {
    %c0_i32 = arith.constant 0 : i32
    %c0_i32_0 = arith.constant 0 : i32
    %c0_i32_1 = arith.constant 0 : i32
    %c0_i32_2 = arith.constant 0 : i32
    return %c0_i32, %c0_i32_0, %c0_i32_1 : i32, i32, i32
  }
  func.func @transform_3(%arg0: i32) -> (i32, i32) {
    %c0_i32 = arith.constant 0 : i32
    %c0_i32_0 = arith.constant 0 : i32
    return %arg0, %c0_i32 : i32, i32
  }
}

</mosaic_0001>

<llo_original>
// kernel: fully_connected_forward.1
$region0: #{fully_connected_forward.1}
  #allocation0 [shape = 'u32[]', space=smem, size = 0x4, offset = 0x4, fixed_abs, tag = 'smem constant byte address 0x4 - core index']
  #allocation1 [shape = 'u32[144,128]{1,0:T(1,128)}', space=vmem, size = 0x12000, scoped, tag = 'internal scratch']
  %s0 = inlined_call_operand.vmem [shape: f32[8,128], index: 0, kind: input, shape index: {}]
  %s1 = inlined_call_operand.hbm [shape: f32[3,128,128], index: 1, kind: input, shape index: {}]
  %s2 = inlined_call_operand.vmem [shape: f32[3,1,128], index: 2, kind: input, shape index: {}]
  %s3 = inlined_call_operand.vmem [shape: f32[8,128], index: 3, kind: output, shape index: {}]
  %s4 = sld [smem:[#allocation0]]
  $region26: #{fully_connected_forward.1} parent=0
    _
  %s6 = ssub.s32 1, %s4
  %s7 = scalar_select 0, %s6, %s4
  $region1: #{fully_connected_forward.1} parent=0
    #allocation2 [shape = 'u8[196608]{0}', space=vmem, size = 0x30000, scoped, tag = 'input window, operand 1, single buffered']
    #allocation3 [shape = 's32[1]{0}', space=sflag, size = 0x4, scoped, tag = 'scoped memory for fully_connected_forward.1']
    %8 = vsyncpa [#allocation3], 0
    // Predicated region
    $region2: #{fully_connected_forward.1} parent=1 // pred_check
      _
    $region3: #{fully_connected_forward.1} parent=1 // pred_check_branch
      %10 = sbr.rel (0) target = $region5
    $region4: #{fully_connected_forward.1} parent=1 // pred_region
      _
    $region5: #{fully_connected_forward.1} parent=1 // pred_fallthru
      _
    // Predicated region
    $region6: #{fully_connected_forward.1} parent=1 // pred_check
      _
    $region7: #{fully_connected_forward.1} parent=1 // pred_check_branch
      %12 = sbr.rel (0) target = $region9
    $region8: #{fully_connected_forward.1} parent=1 // pred_region
      %s14 = ssub.s32 6144, 6144
      %15 = vsyncadd [#allocation3], %s14
      %s16 = sshll.u32 [#allocation2], 4
      %s17 = int_to_ptr.vmem [resolvable:$true] %s16
      %22 = dma.hbm_to_vmem [thread:$0]  %s1, 6144, %s17, [#allocation3], 128, 128, 8
    $region9: #{fully_connected_forward.1} parent=1 // pred_fallthru
      _
    // Predicated region
    $region10: #{fully_connected_forward.1} parent=1 // pred_check
      _
    $region11: #{fully_connected_forward.1} parent=1 // pred_check_branch
      %24 = sbr.rel (0) target = $region13
    $region12: #{fully_connected_forward.1} parent=1 // pred_region
      _
    $region13: #{fully_connected_forward.1} parent=1 // pred_fallthru
      _
    // Predicated region
    $region14: #{fully_connected_forward.1} parent=1 // pred_check
      _
    $region15: #{fully_connected_forward.1} parent=1 // pred_check_branch
      %26 = sbr.rel (0) target = $region17
    $region16: #{fully_connected_forward.1} parent=1 // pred_region
      %27 = dma.done [#allocation3], 6144
    $region17: #{fully_connected_forward.1} parent=1 // pred_fallthru
      _
    %v28 = vld [vmem:[%s0] sm:$0xff]
    %v29 = vld [vmem:[#allocation2] sm:$0xff]
    %v30 = vld [vmem:[#allocation2 + $0x8] sm:$0xff]
    %v31 = vld [vmem:[#allocation2 + $0x10] sm:$0xff]
    %v32 = vld [vmem:[#allocation2 + $0x18] sm:$0xff]
    %v33 = vld [vmem:[#allocation2 + $0x20] sm:$0xff]
    %v34 = vld [vmem:[#allocation2 + $0x28] sm:$0xff]
    %v35 = vld [vmem:[#allocation2 + $0x30] sm:$0xff]
    %v36 = vld [vmem:[#allocation2 + $0x38] sm:$0xff]
    %v37 = vld [vmem:[#allocation2 + $0x40] sm:$0xff]
    %v38 = vld [vmem:[#allocation2 + $0x48] sm:$0xff]
    %v39 = vld [vmem:[#allocation2 + $0x50] sm:$0xff]
    %v40 = vld [vmem:[#allocation2 + $0x58] sm:$0xff]
    %v41 = vld [vmem:[#allocation2 + $0x60] sm:$0xff]
    %v42 = vld [vmem:[#allocation2 + $0x68] sm:$0xff]
    %v43 = vld [vmem:[#allocation2 + $0x70] sm:$0xff]
    %v44 = vld [vmem:[#allocation2 + $0x78] sm:$0xff]
    %v45 = vld [vmem:[%s2] sm:$0x1]
    %v47 = vlaneseq
    %v48 = vshrl.u32 %v47, 7
    %v49 = vsub.s32 0, %v48
    %v50 = vrot.slane %v45, %v49
    %52 = vmatprep.subr.mxu0 0.0
    %53 = vmatpush1.msra.mxu0 %v29
    %54 = vmatprep.subr.mxu0 0.0
    %55 = vmatpush1.msra.mxu0 %v30
    %56 = vmatprep.subr.mxu0 0.0
    %57 = vmatpush1.msra.mxu0 %v31
    %58 = vmatprep.subr.mxu0 0.0
    %59 = vmatpush1.msra.mxu0 %v32
    %60 = vmatprep.subr.mxu0 0.0
    %61 = vmatpush1.msra.mxu0 %v33
    %62 = vmatprep.subr.mxu0 0.0
    %63 = vmatpush1.msra.mxu0 %v34
    %64 = vmatprep.subr.mxu0 0.0
    %65 = vmatpush1.msra.mxu0 %v35
    %66 = vmatprep.subr.mxu0 0.0
    %67 = vmatpush1.msra.mxu0 %v36
    %68 = vmatprep.subr.mxu0 0.0
    %69 = vmatpush1.msra.mxu0 %v37
    %70 = vmatprep.subr.mxu0 0.0
    %71 = vmatpush1.msra.mxu0 %v38
    %72 = vmatprep.subr.mxu0 0.0
    %73 = vmatpush1.msra.mxu0 %v39
    %74 = vmatprep.subr.mxu0 0.0
    %75 = vmatpush1.msra.mxu0 %v40
    %76 = vmatprep.subr.mxu0 0.0
    %77 = vmatpush1.msra.mxu0 %v41
    %78 = vmatprep.subr.mxu0 0.0
    %79 = vmatpush1.msra.mxu0 %v42
    %80 = vmatprep.subr.mxu0 0.0
    %81 = vmatpush1.msra.mxu0 %v43
    %82 = vmatprep.subr.mxu0 0.0
    %83 = vmatpush1.msra.mxu0 %v44
    %84 = vmatprep.subr.mxu0 0.0
    %85 = vmatpush1.msra.mxu0 0.0
    %86 = vmatprep.subr.mxu0 0.0
    %87 = vmatpush1.msra.mxu0 0.0
    %88 = vmatprep.subr.mxu0 0.0
    %89 = vmatpush1.msra.mxu0 0.0
    %90 = vmatprep.subr.mxu0 0.0
    %91 = vmatpush1.msra.mxu0 0.0
    %92 = vmatprep.subr.mxu0 0.0
    %93 = vmatpush1.msra.mxu0 0.0
    %94 = vmatprep.subr.mxu0 0.0
    %95 = vmatpush1.msra.mxu0 0.0
    %96 = vmatprep.subr.mxu0 0.0
    %97 = vmatpush1.msra.mxu0 0.0
    %98 = vmatprep.subr.mxu0 0.0
    %99 = vmatpush1.msra.mxu0 0.0
    %100 = vmatprep.subr.mxu0 0.0
    %101 = vmatpush1.msra.mxu0 0.0
    %102 = vmatprep.subr.mxu0 0.0
    %103 = vmatpush1.msra.mxu0 0.0
    %104 = vmatprep.subr.mxu0 0.0
    %105 = vmatpush1.msra.mxu0 0.0
    %106 = vmatprep.subr.mxu0 0.0
    %107 = vmatpush1.msra.mxu0 0.0
    %108 = vmatprep.subr.mxu0 0.0
    %109 = vmatpush1.msra.mxu0 0.0
    %110 = vmatprep.subr.mxu0 0.0
    %111 = vmatpush1.msra.mxu0 0.0
    %112 = vmatprep.subr.mxu0 0.0
    %113 = vmatpush1.msra.mxu0 0.0
    %114 = vmatprep.subr.mxu0 0.0
    %115 = vmatpush1.msra.mxu0 0.0
    %116 = vmatprep.mubr.f32.mxu0 0.0
    %117 = vmatmul.mubr.f32.gmra.mrb[0].mxu0 %v28
    %v118 = vpop.f32.mrb[0].mxu0
    %v119 = vadd.f32 %v50, %v118
    %v120 = vpop.f32.mrb[0].mxu0
    %121 = vdwg.mxu0
    %v122 = vmax.f32 %v119, 0.0
    %s123 = scalar_lea.vmem [#allocation2], 128
    %v124 = vld [vmem:[%s123] sm:$0xff]
    %v125 = vld [vmem:[%s123 + $0x8] sm:$0xff]
    %v126 = vld [vmem:[%s123 + $0x10] sm:$0xff]
    %v127 = vld [vmem:[%s123 + $0x18] sm:$0xff]
    %v128 = vld [vmem:[%s123 + $0x20] sm:$0xff]
    %v129 = vld [vmem:[%s123 + $0x28] sm:$0xff]
    %v130 = vld [vmem:[%s123 + $0x30] sm:$0xff]
    %v131 = vld [vmem:[%s123 + $0x38] sm:$0xff]
    %v132 = vld [vmem:[%s123 + $0x40] sm:$0xff]
    %v133 = vld [vmem:[%s123 + $0x48] sm:$0xff]
    %v134 = vld [vmem:[%s123 + $0x50] sm:$0xff]
    %v135 = vld [vmem:[%s123 + $0x58] sm:$0xff]
    %v136 = vld [vmem:[%s123 + $0x60] sm:$0xff]
    %v137 = vld [vmem:[%s123 + $0x68] sm:$0xff]
    %v138 = vld [vmem:[%s123 + $0x70] sm:$0xff]
    %v139 = vld [vmem:[%s123 + $0x78] sm:$0xff]
    %s140 = scalar_lea.vmem %s2, 1
    %v141 = vld [vmem:[%s140] sm:$0x1]
    %v143 = vlaneseq
    %v144 = vshrl.u32 %v143, 7
    %v145 = vsub.s32 0, %v144
    %v146 = vrot.slane %v141, %v145
    %148 = vmatprep.subr.mxu0 0.0
    %149 = vmatpush1.msra.mxu0 %v124
    %150 = vmatprep.subr.mxu0 0.0
    %151 = vmatpush1.msra.mxu0 %v125
    %152 = vmatprep.subr.mxu0 0.0
    %153 = vmatpush1.msra.mxu0 %v126
    %154 = vmatprep.subr.mxu0 0.0
    %155 = vmatpush1.msra.mxu0 %v127
    %156 = vmatprep.subr.mxu0 0.0
    %157 = vmatpush1.msra.mxu0 %v128
    %158 = vmatprep.subr.mxu0 0.0
    %159 = vmatpush1.msra.mxu0 %v129
    %160 = vmatprep.subr.mxu0 0.0
    %161 = vmatpush1.msra.mxu0 %v130
    %162 = vmatprep.subr.mxu0 0.0
    %163 = vmatpush1.msra.mxu0 %v131
    %164 = vmatprep.subr.mxu0 0.0
    %165 = vmatpush1.msra.mxu0 %v132
    %166 = vmatprep.subr.mxu0 0.0
    %167 = vmatpush1.msra.mxu0 %v133
    %168 = vmatprep.subr.mxu0 0.0
    %169 = vmatpush1.msra.mxu0 %v134
    %170 = vmatprep.subr.mxu0 0.0
    %171 = vmatpush1.msra.mxu0 %v135
    %172 = vmatprep.subr.mxu0 0.0
    %173 = vmatpush1.msra.mxu0 %v136
    %174 = vmatprep.subr.mxu0 0.0
    %175 = vmatpush1.msra.mxu0 %v137
    %176 = vmatprep.subr.mxu0 0.0
    %177 = vmatpush1.msra.mxu0 %v138
    %178 = vmatprep.subr.mxu0 0.0
    %179 = vmatpush1.msra.mxu0 %v139
    %180 = vmatprep.subr.mxu0 0.0
    %181 = vmatpush1.msra.mxu0 0.0
    %182 = vmatprep.subr.mxu0 0.0
    %183 = vmatpush1.msra.mxu0 0.0
    %184 = vmatprep.subr.mxu0 0.0
    %185 = vmatpush1.msra.mxu0 0.0
    %186 = vmatprep.subr.mxu0 0.0
    %187 = vmatpush1.msra.mxu0 0.0
    %188 = vmatprep.subr.mxu0 0.0
    %189 = vmatpush1.msra.mxu0 0.0
    %190 = vmatprep.subr.mxu0 0.0
    %191 = vmatpush1.msra.mxu0 0.0
    %192 = vmatprep.subr.mxu0 0.0
    %193 = vmatpush1.msra.mxu0 0.0
    %194 = vmatprep.subr.mxu0 0.0
    %195 = vmatpush1.msra.mxu0 0.0
    %196 = vmatprep.subr.mxu0 0.0
    %197 = vmatpush1.msra.mxu0 0.0
    %198 = vmatprep.subr.mxu0 0.0
    %199 = vmatpush1.msra.mxu0 0.0
    %200 = vmatprep.subr.mxu0 0.0
    %201 = vmatpush1.msra.mxu0 0.0
    %202 = vmatprep.subr.mxu0 0.0
    %203 = vmatpush1.msra.mxu0 0.0
    %204 = vmatprep.subr.mxu0 0.0
    %205 = vmatpush1.msra.mxu0 0.0
    %206 = vmatprep.subr.mxu0 0.0
    %207 = vmatpush1.msra.mxu0 0.0
    %208 = vmatprep.subr.mxu0 0.0
    %209 = vmatpush1.msra.mxu0 0.0
    %210 = vmatprep.subr.mxu0 0.0
    %211 = vmatpush1.msra.mxu0 0.0
    %212 = vmatprep.mubr.f32.mxu0 0.0
    %213 = vmatmul.mubr.f32.gmra.mrb[0].mxu0 %v122
    %v214 = vpop.f32.mrb[0].mxu0
    %v215 = vadd.f32 %v146, %v214
    %v216 = vpop.f32.mrb[0].mxu0
    %217 = vdwg.mxu0
    %v218 = vmax.f32 %v215, 0.0
    %s219 = scalar_lea.vmem [#allocation2], 256
    %v220 = vld [vmem:[%s219] sm:$0xff]
    %v221 = vld [vmem:[%s219 + $0x8] sm:$0xff]
    %v222 = vld [vmem:[%s219 + $0x10] sm:$0xff]
    %v223 = vld [vmem:[%s219 + $0x18] sm:$0xff]
    %v224 = vld [vmem:[%s219 + $0x20] sm:$0xff]
    %v225 = vld [vmem:[%s219 + $0x28] sm:$0xff]
    %v226 = vld [vmem:[%s219 + $0x30] sm:$0xff]
    %v227 = vld [vmem:[%s219 + $0x38] sm:$0xff]
    %v228 = vld [vmem:[%s219 + $0x40] sm:$0xff]
    %v229 = vld [vmem:[%s219 + $0x48] sm:$0xff]
    %v230 = vld [vmem:[%s219 + $0x50] sm:$0xff]
    %v231 = vld [vmem:[%s219 + $0x58] sm:$0xff]
    %v232 = vld [vmem:[%s219 + $0x60] sm:$0xff]
    %v233 = vld [vmem:[%s219 + $0x68] sm:$0xff]
    %v234 = vld [vmem:[%s219 + $0x70] sm:$0xff]
    %v235 = vld [vmem:[%s219 + $0x78] sm:$0xff]
    %s236 = scalar_lea.vmem %s2, 2
    %v237 = vld [vmem:[%s236] sm:$0x1]
    %v239 = vlaneseq
    %v240 = vshrl.u32 %v239, 7
    %v241 = vsub.s32 0, %v240
    %v242 = vrot.slane %v237, %v241
    %244 = vmatprep.subr.mxu0 0.0
    %245 = vmatpush1.msra.mxu0 %v220
    %246 = vmatprep.subr.mxu0 0.0
    %247 = vmatpush1.msra.mxu0 %v221
    %248 = vmatprep.subr.mxu0 0.0
    %249 = vmatpush1.msra.mxu0 %v222
    %250 = vmatprep.subr.mxu0 0.0
    %251 = vmatpush1.msra.mxu0 %v223
    %252 = vmatprep.subr.mxu0 0.0
    %253 = vmatpush1.msra.mxu0 %v224
    %254 = vmatprep.subr.mxu0 0.0
    %255 = vmatpush1.msra.mxu0 %v225
    %256 = vmatprep.subr.mxu0 0.0
    %257 = vmatpush1.msra.mxu0 %v226
    %258 = vmatprep.subr.mxu0 0.0
    %259 = vmatpush1.msra.mxu0 %v227
    %260 = vmatprep.subr.mxu0 0.0
    %261 = vmatpush1.msra.mxu0 %v228
    %262 = vmatprep.subr.mxu0 0.0
    %263 = vmatpush1.msra.mxu0 %v229
    %264 = vmatprep.subr.mxu0 0.0
    %265 = vmatpush1.msra.mxu0 %v230
    %266 = vmatprep.subr.mxu0 0.0
    %267 = vmatpush1.msra.mxu0 %v231
    %268 = vmatprep.subr.mxu0 0.0
    %269 = vmatpush1.msra.mxu0 %v232
    %270 = vmatprep.subr.mxu0 0.0
    %271 = vmatpush1.msra.mxu0 %v233
    %272 = vmatprep.subr.mxu0 0.0
    %273 = vmatpush1.msra.mxu0 %v234
    %274 = vmatprep.subr.mxu0 0.0
    %275 = vmatpush1.msra.mxu0 %v235
    %276 = vmatprep.subr.mxu0 0.0
    %277 = vmatpush1.msra.mxu0 0.0
    %278 = vmatprep.subr.mxu0 0.0
    %279 = vmatpush1.msra.mxu0 0.0
    %280 = vmatprep.subr.mxu0 0.0
    %281 = vmatpush1.msra.mxu0 0.0
    %282 = vmatprep.subr.mxu0 0.0
    %283 = vmatpush1.msra.mxu0 0.0
    %284 = vmatprep.subr.mxu0 0.0
    %285 = vmatpush1.msra.mxu0 0.0
    %286 = vmatprep.subr.mxu0 0.0
    %287 = vmatpush1.msra.mxu0 0.0
    %288 = vmatprep.subr.mxu0 0.0
    %289 = vmatpush1.msra.mxu0 0.0
    %290 = vmatprep.subr.mxu0 0.0
    %291 = vmatpush1.msra.mxu0 0.0
    %292 = vmatprep.subr.mxu0 0.0
    %293 = vmatpush1.msra.mxu0 0.0
    %294 = vmatprep.subr.mxu0 0.0
    %295 = vmatpush1.msra.mxu0 0.0
    %296 = vmatprep.subr.mxu0 0.0
    %297 = vmatpush1.msra.mxu0 0.0
    %298 = vmatprep.subr.mxu0 0.0
    %299 = vmatpush1.msra.mxu0 0.0
    %300 = vmatprep.subr.mxu0 0.0
    %301 = vmatpush1.msra.mxu0 0.0
    %302 = vmatprep.subr.mxu0 0.0
    %303 = vmatpush1.msra.mxu0 0.0
    %304 = vmatprep.subr.mxu0 0.0
    %305 = vmatpush1.msra.mxu0 0.0
    %306 = vmatprep.subr.mxu0 0.0
    %307 = vmatpush1.msra.mxu0 0.0
    %308 = vmatprep.mubr.f32.mxu0 0.0
    %309 = vmatmul.mubr.f32.gmra.mrb[0].mxu0 %v218
    %v310 = vpop.f32.mrb[0].mxu0
    %v311 = vadd.f32 %v242, %v310
    %v312 = vpop.f32.mrb[0].mxu0
    %313 = vdwg.mxu0
    %314 = vst [vmem:[%s3] sm:$0xff] %v311
    // Predicated region
    $region18: #{fully_connected_forward.1} parent=1 // pred_check
      _
    $region19: #{fully_connected_forward.1} parent=1 // pred_check_branch
      %316 = sbr.rel (0) target = $region21
    $region20: #{fully_connected_forward.1} parent=1 // pred_region
      _
    $region21: #{fully_connected_forward.1} parent=1 // pred_fallthru
      _
    // Predicated region
    $region22: #{fully_connected_forward.1} parent=1 // pred_check
      _
    $region23: #{fully_connected_forward.1} parent=1 // pred_check_branch
      %318 = sbr.rel (0) target = $region25
    $region24: #{fully_connected_forward.1} parent=1 // pred_region
      _
    $region25: #{fully_connected_forward.1} parent=1 // pred_fallthru
      _
    %319 = vsyncpa [#allocation3], 1

</llo_original>
